<compile_context>
chip_gen: v5e
topology: v5e:2x2
jax: 0.10.0
libtpu: 0.0.40
codegen_flags: <defaults>
</compile_context>

<pallas_src>
import numpy as np

import jax
import jax.numpy as jnp
from jax.experimental import pallas as pl
from jax.experimental.pallas import tpu as pltpu

_LANE = 128
_ACC_ROWS = 32                      # (32,128) f32 accumulator = 4 vregs = 4 add chains
_ALIGN_ELEMS = _ACC_ROWS * _LANE    # 4096: granularity of the kernel main path
_BLOCK_BYTES = 8 * 1024 * 1024      # ~8 MiB per input per grid step
_VMEM_LIMIT = 40 * 1024 * 1024      # 2 inputs x 2 bufs x 8 MiB + headroom (< 64 MiB v7x VMEM)


def _num_tensorcores():
    # 2-way grid split only on 2-TC chips (v7x).  On 1-TC v5e/v6e the second
    # grid "core" would just be a serial loop over clamped phantom blocks.
    try:
        kind = jax.devices()[0].device_kind.lower()
    except Exception:
        return 1
    return 2 if ("v7" in kind or "7x" in kind) else 1


def _make_kernel(total_rows, blocks_per_core, block_rows):
    num_folds = block_rows // _ACC_ROWS

    def kernel(p_ref, t_ref, o_ref):
        c = pl.program_id(0)
        i = pl.program_id(1)

        @pl.when(i == 0)
        def _():
            o_ref[...] = jnp.zeros_like(o_ref)

        # Logical (un-clamped) first row of this block.  Blocks whose rows run
        # past total_rows (partial tail block, or phantom block on the other
        # core) take the masked path; interior blocks stay mask-free.
        row_start = (c * blocks_per_core + i) * block_rows
        is_full = row_start + block_rows <= total_rows

        p = p_ref[...].astype(jnp.float32)
        t = t_ref[...].astype(jnp.float32)

        def _accumulate(diff):
            # Fold onto the (32,128) accumulator: 4 independent vreg add chains
            # (pure VPU), no per-step cross-lane reduce.
            o_ref[...] += diff.reshape(num_folds, _ACC_ROWS, _LANE).sum(axis=0)

        @pl.when(is_full)
        def _():
            _accumulate(jnp.abs(p - t))

        @pl.when(jnp.logical_not(is_full))
        def _():
            row_ids = (
                jax.lax.broadcasted_iota(jnp.int32, (block_rows, 1), 0) + row_start
            )
            # True select (NOT multiply-by-mask): out-of-range rows hold
            # unspecified VMEM data that may be NaN/Inf.
            _accumulate(jnp.where(row_ids < total_rows, jnp.abs(p - t), 0.0))

    return kernel


def _abs_sum_pallas(p2, t2, rows, itemsize):
    """sum(|p - t|) over a (rows, 128) lane-dense slab; rows % 32 == 0."""
    num_cores = _num_tensorcores()

    # ~8 MiB per input per grid step, rounded down to the accumulator fold size.
    block_rows_cap = max(
        _ACC_ROWS, (_BLOCK_BYTES // (_LANE * itemsize)) // _ACC_ROWS * _ACC_ROWS
    )
    block_rows = min(block_rows_cap, rows)
    num_blocks = pl.cdiv(rows, block_rows)
    blocks_per_core = pl.cdiv(num_blocks, num_cores)
    has_phantom = num_cores * blocks_per_core > num_blocks

    def in_map(c, i):
        b = c * blocks_per_core + i
        if has_phantom:
            # Clamp phantom (fully out-of-range) block indices so the DMA stays
            # legal; the kernel's row mask zeroes their contribution.
            b = jnp.minimum(b, num_blocks - 1)
        return (b, 0)

    kernel = _make_kernel(rows, blocks_per_core, block_rows)
    n_elems = rows * _LANE

    partials = pl.pallas_call(
        kernel,
        out_shape=jax.ShapeDtypeStruct((num_cores, _ACC_ROWS, _LANE), jnp.float32),
        grid=(num_cores, blocks_per_core),
        in_specs=[
            pl.BlockSpec((block_rows, _LANE), in_map),
            pl.BlockSpec((block_rows, _LANE), in_map),
        ],
        out_specs=pl.BlockSpec((None, _ACC_ROWS, _LANE), lambda c, i: (c, 0, 0)),
        compiler_params=pltpu.CompilerParams(
            dimension_semantics=("parallel", "arbitrary"),
            vmem_limit_bytes=_VMEM_LIMIT,
        ),
        cost_estimate=pl.CostEstimate(
            flops=3 * n_elems,
            transcendentals=0,
            bytes_accessed=2 * n_elems * itemsize + num_cores * _ACC_ROWS * _LANE * 4,
        ),
    )(p2, t2)

    # One small cross-lane/sublane reduce of the (num_cores, 32, 128) partials.
    return jnp.sum(partials)


def _weighted_abs_mean(pred, target, weight_scalar):
    """mean(weight * |pred - target|) with a scalar weight."""
    n = int(np.prod(pred.shape))
    p = pred.reshape(-1)          # original dtype is DMA'd; upcast to f32 in-kernel
    t = target.reshape(-1)
    itemsize = jnp.dtype(pred.dtype).itemsize

    n_main = (n // _ALIGN_ELEMS) * _ALIGN_ELEMS
    total = jnp.float32(0.0)
    if n_main > 0:
        rows = n_main // _LANE                      # multiple of 32
        # Identity slice when n is already 4096-aligned (the common case); the
        # full-tensor jnp.pad copy is gone.
        p2 = p[:n_main].reshape(rows, _LANE)
        t2 = t[:n_main].reshape(rows, _LANE)
        total = total + _abs_sum_pallas(p2, t2, rows, itemsize)
    if n_main < n:
        # Tiny (<4096 elem) unaligned tail reduced with plain jnp.
        tail = jnp.abs(p[n_main:].astype(jnp.float32) - t[n_main:].astype(jnp.float32))
        total = total + jnp.sum(tail)

    # mean(weight * |p - t|) with scalar weight == weight * sum(|p - t|) / N
    return total * weight_scalar / jnp.float32(n)


@jax.jit
def _loss_single(pred, target, w):
    return _weighted_abs_mean(pred, target, w)


@jax.jit
def _loss_list(preds, targets, w):
    # Same-shaped tensors share the pallas_call compile cache; a single jitted
    # program removes per-call host dispatch overhead and fuses the final mean.
    errs = [_weighted_abs_mean(p, t, w) for p, t in zip(preds, targets)]
    return jnp.mean(jnp.stack(errs))


def base_loss_forward(preds, targets, weight=None):
    """Mirrors BaseLoss.forward dispatch semantics (list / tensor)."""
    if weight is None:
        w = jnp.float32(1.0)
    else:
        # TODO(synk): per-element weight tensors (subclass behavior) unsupported;
        # scalar weight only, matching BaseLoss's default new_ones(1).
        w = jnp.asarray(weight, jnp.float32).reshape(-1)[0]

    if isinstance(preds, (list, tuple)):
        return _loss_list(list(preds), list(targets), w)
    return _loss_single(preds, targets, w)


if __name__ == "__main__":
    key = jax.random.PRNGKey(0)
    k1, k2, k3, k4, k5, k6 = jax.random.split(key, 6)

    # single-tensor case (NCHW; 8192 elems -> full Pallas main path)
    x = jax.random.normal(k1, (2, 4, 32, 32), dtype=jnp.float32)
    y = jax.random.normal(k2, (2, 4, 32, 32), dtype=jnp.float32)
    err_single = base_loss_forward(x, y)
    jax.block_until_ready(err_single)

    # list-of-tensors case
    xs = [x, jax.random.normal(k3, (2, 4, 32, 32), dtype=jnp.float32)]
    ys = [y, jax.random.normal(k4, (2, 4, 32, 32), dtype=jnp.float32)]
    err_list = base_loss_forward(xs, ys)
    jax.block_until_ready(err_list)

    # unaligned numel (12800 = 3*4096 + 512): Pallas main path + jnp tail,
    # with an explicit scalar weight.
    u = jax.random.normal(k5, (2, 4, 40, 40), dtype=jnp.float32)
    v = jax.random.normal(k6, (2, 4, 40, 40), dtype=jnp.float32)
    err_unaligned = base_loss_forward(u, v, weight=2.0)
    jax.block_until_ready(err_unaligned)

    # correctness checks vs plain-JAX references
    ref_single = jnp.mean(jnp.abs(x - y))
    ref_list = jnp.mean(
        jnp.stack([jnp.mean(jnp.abs(a - b)) for a, b in zip(xs, ys)])
    )
    ref_unaligned = 2.0 * jnp.mean(jnp.abs(u - v))

    assert np.allclose(np.asarray(err_single), np.asarray(ref_single), rtol=1e-5, atol=1e-6)
    assert np.allclose(np.asarray(err_list), np.asarray(ref_list), rtol=1e-5, atol=1e-6)
    assert np.allclose(np.asarray(err_unaligned), np.asarray(ref_unaligned), rtol=1e-5, atol=1e-6)

    print("KERNEL_OK")
</pallas_src>

<mosaic_0001>
module attributes {stable_mosaic.version = 11 : i64} {
  func.func @kernel(%arg0: i32, %arg1: i32, %arg2: memref<64x128xf32, #tpu.memory_space<vmem>>, %arg3: memref<64x128xf32, #tpu.memory_space<vmem>>, %arg4: memref<1x32x128xf32, #tpu.memory_space<vmem>>) attributes {dimension_semantics = [#tpu.dimension_semantics<parallel>, #tpu.dimension_semantics<arbitrary>], iteration_bounds = array<i64: 1, 1>, scalar_prefetch = 0 : i64, scratch_operands = 0 : i64, tpu.core_type = #tpu.core_type<tc>, window_params = [{transform_indices = @transform_0, window_bounds = array<i64: 64, 128>}, {transform_indices = @transform_1, window_bounds = array<i64: 64, 128>}, {transform_indices = @transform_2, window_bounds = array<i64: 1, 32, 128>}]} {
    %c0_i32 = arith.constant 0 : i32
    %0 = arith.cmpi eq, %arg1, %c0_i32 : i32
    %1 = arith.extui %0 : i1 to i32
    %c0_i32_0 = arith.constant 0 : i32
    %2 = arith.cmpi ne, %1, %c0_i32_0 : i32
    scf.if %2 {
      %cst = arith.constant 0.000000e+00 : f32
      %15 = vector.broadcast %cst : f32 to vector<32x128xf32>
      %c0_8 = arith.constant 0 : index
      %c0_9 = arith.constant 0 : index
      %c0_10 = arith.constant 0 : index
      %16 = vector.load %arg4[%c0_8, %c0_9, %c0_10] : memref<1x32x128xf32, #tpu.memory_space<vmem>>, vector<1x32x128xf32>
      %17 = vector.shape_cast %16 : vector<1x32x128xf32> to vector<32x128xf32>
      %18 = vector.shape_cast %15 : vector<32x128xf32> to vector<1x32x128xf32>
      tpu.vector_store %arg4[%c0_8, %c0_9, %c0_10], %18 {strides = array<i32>} : memref<1x32x128xf32, #tpu.memory_space<vmem>>, vector<1x32x128xf32>,
    } else {
    }
    %c1_i32 = arith.constant 1 : i32
    %3 = arith.muli %arg0, %c1_i32 : i32
    %4 = arith.addi %3, %arg1 : i32
    %c64_i32 = arith.constant 64 : i32
    %5 = arith.muli %4, %c64_i32 : i32
    %c64_i32_1 = arith.constant 64 : i32
    %6 = arith.addi %5, %c64_i32_1 : i32
    %c64_i32_2 = arith.constant 64 : i32
    %7 = arith.cmpi sle, %6, %c64_i32_2 : i32
    %c0 = arith.constant 0 : index
    %c0_3 = arith.constant 0 : index
    %8 = vector.load %arg2[%c0, %c0_3] : memref<64x128xf32, #tpu.memory_space<vmem>>, vector<64x128xf32>
    %c0_4 = arith.constant 0 : index
    %c0_5 = arith.constant 0 : index
    %9 = vector.load %arg3[%c0_4, %c0_5] : memref<64x128xf32, #tpu.memory_space<vmem>>, vector<64x128xf32>
    %10 = arith.extui %7 : i1 to i32
    %c0_i32_6 = arith.constant 0 : i32
    %11 = arith.cmpi ne, %10, %c0_i32_6 : i32
    scf.if %11 {
      %15 = arith.subf %8, %9 : vector<64x128xf32>
      %16 = math.absf %15 : vector<64x128xf32>
      %c0_8 = arith.constant 0 : index
      %c0_9 = arith.constant 0 : index
      %c0_10 = arith.constant 0 : index
      %17 = vector.load %arg4[%c0_8, %c0_9, %c0_10] : memref<1x32x128xf32, #tpu.memory_space<vmem>>, vector<1x32x128xf32>
      %18 = vector.shape_cast %17 : vector<1x32x128xf32> to vector<32x128xf32>
      %19 = vector.shape_cast %16 : vector<64x128xf32> to vector<2x32x128xf32>
      %cst = arith.constant dense<0.000000e+00> : vector<32x128xf32>
      %20 = vector.multi_reduction <add>, %19, %cst [0] : vector<2x32x128xf32> to vector<32x128xf32>
      %21 = arith.addf %18, %20 : vector<32x128xf32>
      %c0_11 = arith.constant 0 : index
      %c0_12 = arith.constant 0 : index
      %c0_13 = arith.constant 0 : index
      %22 = vector.load %arg4[%c0_11, %c0_12, %c0_13] : memref<1x32x128xf32, #tpu.memory_space<vmem>>, vector<1x32x128xf32>
      %23 = vector.shape_cast %22 : vector<1x32x128xf32> to vector<32x128xf32>
      %24 = vector.shape_cast %21 : vector<32x128xf32> to vector<1x32x128xf32>
      tpu.vector_store %arg4[%c0_11, %c0_12, %c0_13], %24 {strides = array<i32>} : memref<1x32x128xf32, #tpu.memory_space<vmem>>, vector<1x32x128xf32>,
    } else {
    }
    %true = arith.constant true
    %12 = arith.xori %7, %true : i1
    %13 = arith.extui %12 : i1 to i32
    %c0_i32_7 = arith.constant 0 : i32
    %14 = arith.cmpi ne, %13, %c0_i32_7 : i32
    scf.if %14 {
      %15 = tpu.iota {dimensions = array<i32: 0>} : vector<64x1xi32>
      %16 = vector.broadcast %5 : i32 to vector<64x1xi32>
      %17 = arith.addi %15, %16 : vector<64x1xi32>
      %c64_i32_8 = arith.constant 64 : i32
      %18 = vector.broadcast %c64_i32_8 : i32 to vector<64x1xi32>
      %19 = arith.cmpi slt, %17, %18 : vector<64x1xi32>
      %20 = arith.subf %8, %9 : vector<64x128xf32>
      %21 = math.absf %20 : vector<64x128xf32>
      %cst = arith.constant 0.000000e+00 : f32
      %22 = vector.shape_cast %19 : vector<64x1xi1> to vector<64x1xi1>
      %23 = vector.broadcast %22 : vector<64x1xi1> to vector<64x128xi1>
      %24 = vector.broadcast %cst : f32 to vector<64x128xf32>
      %25 = arith.select %23, %21, %24 : vector<64x128xi1>, vector<64x128xf32>
      %c0_9 = arith.constant 0 : index
      %c0_10 = arith.constant 0 : index
      %c0_11 = arith.constant 0 : index
      %26 = vector.load %arg4[%c0_9, %c0_10, %c0_11] : memref<1x32x128xf32, #tpu.memory_space<vmem>>, vector<1x32x128xf32>
      %27 = vector.shape_cast %26 : vector<1x32x128xf32> to vector<32x128xf32>
      %28 = vector.shape_cast %25 : vector<64x128xf32> to vector<2x32x128xf32>
      %cst_12 = arith.constant dense<0.000000e+00> : vector<32x128xf32>
      %29 = vector.multi_reduction <add>, %28, %cst_12 [0] : vector<2x32x128xf32> to vector<32x128xf32>
      %30 = arith.addf %27, %29 : vector<32x128xf32>
      %c0_13 = arith.constant 0 : index
      %c0_14 = arith.constant 0 : index
      %c0_15 = arith.constant 0 : index
      %31 = vector.load %arg4[%c0_13, %c0_14, %c0_15] : memref<1x32x128xf32, #tpu.memory_space<vmem>>, vector<1x32x128xf32>
      %32 = vector.shape_cast %31 : vector<1x32x128xf32> to vector<32x128xf32>
      %33 = vector.shape_cast %30 : vector<32x128xf32> to vector<1x32x128xf32>
      tpu.vector_store %arg4[%c0_13, %c0_14, %c0_15], %33 {strides = array<i32>} : memref<1x32x128xf32, #tpu.memory_space<vmem>>, vector<1x32x128xf32>,
    } else {
    }
    return
  }
  func.func @transform_0(%arg0: i32, %arg1: i32) -> (i32, i32) {
    %c1_i32 = arith.constant 1 : i32
    %0 = arith.muli %arg0, %c1_i32 : i32
    %1 = arith.addi %0, %arg1 : i32
    %c0_i32 = arith.constant 0 : i32
    %c0_i32_0 = arith.constant 0 : i32
    return %1, %c0_i32 : i32, i32
  }
  func.func @transform_1(%arg0: i32, %arg1: i32) -> (i32, i32) {
    %c1_i32 = arith.constant 1 : i32
    %0 = arith.muli %arg0, %c1_i32 : i32
    %1 = arith.addi %0, %arg1 : i32
    %c0_i32 = arith.constant 0 : i32
    %c0_i32_0 = arith.constant 0 : i32
    return %1, %c0_i32 : i32, i32
  }
  func.func @transform_2(%arg0: i32, %arg1: i32) -> (i32, i32, i32) {
    %c0_i32 = arith.constant 0 : i32
    %c0_i32_0 = arith.constant 0 : i32
    %c0_i32_1 = arith.constant 0 : i32
    return %arg0, %c0_i32, %c0_i32_0 : i32, i32, i32
  }
}

</mosaic_0001>

<llo_original>
// kernel: _loss_single.1
$region0: #{_loss_single.1}
  #allocation0 [shape = 'u32[]', space=smem, size = 0x4, offset = 0x4, fixed_abs, tag = 'smem constant byte address 0x4 - core index']
  #allocation1 [shape = 'u32[72,128]{1,0:T(1,128)}', space=vmem, size = 0x9000, scoped, tag = 'internal scratch']
  %s0 = inlined_call_operand.vmem [shape: f32[64,128], index: 0, kind: input, shape index: {}]
  %s1 = inlined_call_operand.vmem [shape: f32[64,128], index: 1, kind: input, shape index: {}]
  %s2 = inlined_call_operand.vmem [shape: f32[1,32,128], index: 2, kind: output, shape index: {}]
  %s3 = sld [smem:[#allocation0]]
  $region30: #{_loss_single.1} parent=0
    _
  %s5 = ssub.s32 1, %s3
  %s6 = scalar_select 0, %s5, %s3
  // Predicated region
  $region2: #{_loss_single.1} parent=0 // pred_check
    _
  $region3: #{_loss_single.1} parent=0 // pred_check_branch
    %8 = sbr.rel (0) target = $region5
  $region4: #{_loss_single.1} parent=0 // pred_region
    %s9 = sadd.s32 0, 0
    %s10 = smul.u32 8, %s9
    %p11 = scmp.lt.s32.totalorder %s10, 7
    %s12 = scalar_select %p11, %s10, 7
    %s13 = smul.addr %s12, 8
    %s14 = scalar_lea.vmem %s0, %s13
    %s15 = sadd.s32 0, 0
    %s16 = smul.u32 8, %s15
  $region5: #{_loss_single.1} parent=0 // pred_fallthru
    _
  // Predicated region
  $region6: #{_loss_single.1} parent=0 // pred_check
    _
  $region7: #{_loss_single.1} parent=0 // pred_check_branch
    %18 = sbr.rel (0) target = $region9
  $region8: #{_loss_single.1} parent=0 // pred_region
    %s19 = sadd.s32 0, 0
    %s20 = smul.u32 8, %s19
    %p21 = scmp.lt.s32.totalorder %s20, 7
    %s22 = scalar_select %p21, %s20, 7
    %s23 = smul.addr %s22, 8
    %s24 = scalar_lea.vmem %s1, %s23
    %s25 = sadd.s32 0, 0
    %s26 = smul.u32 8, %s25
  $region9: #{_loss_single.1} parent=0 // pred_fallthru
    _
  %s27 = sadd.s32 0, 0
  %s28 = smul.u32 8, %s27
  %p29 = scmp.lt.s32.totalorder %s28, 7
  %s30 = scalar_select %p29, %s28, 7
  %s31 = smul.addr %s30, 8
  %s32 = scalar_lea.vmem %s0, %s31
  %s33 = sadd.s32 0, 0
  %s34 = smul.u32 8, %s33
  %p35 = scmp.lt.s32.totalorder %s34, 7
  %s36 = scalar_select %p35, %s34, 7
  %s37 = smul.addr %s36, 8
  %s38 = scalar_lea.vmem %s1, %s37
  %s39 = sadd.s32 0, 0
  %s40 = smul.u32 8, %s39
  %p41 = scmp.lt.s32.totalorder %s40, 7
  %s42 = scalar_select %p41, %s40, 7
  %s43 = smul.addr %s42, 8
  %s44 = scalar_lea.vmem %s0, %s43
  %s45 = sadd.s32 0, 0
  %s46 = smul.u32 8, %s45
  %s47 = sadd.s32 0, 0
  %s48 = smul.u32 8, %s47
  %p49 = scmp.lt.s32.totalorder %s48, 7
  %s50 = scalar_select %p49, %s48, 7
  %s51 = smul.addr %s50, 8
  %s52 = scalar_lea.vmem %s1, %s51
  %s53 = sadd.s32 0, 0
  %s54 = smul.u32 8, %s53
  %p55 = scmp.eq.s32.totalorder 0, 0
  // Predicated region
  $region10: #{_loss_single.1} parent=0 // pred_check
    %p56 = pneg %p55
  $region11: #{_loss_single.1} parent=0 // pred_check_branch
    %58 = sbr.rel (%p56) target = $region13
  $region12: #{_loss_single.1} parent=0 // pred_region
    %59 = vst [vmem:[%s2] sm:$0xff] 0.0
    %60 = vst [vmem:[%s2 + $0x8] sm:$0xff] 0.0
    %61 = vst [vmem:[%s2 + $0x10] sm:$0xff] 0.0
    %62 = vst [vmem:[%s2 + $0x18] sm:$0xff] 0.0
  $region13: #{_loss_single.1} parent=0 // pred_fallthru
    _
  %s63 = sadd.s32 0, 0
  %s64 = smul.u32 %s63, 64
  %s65 = sadd.s32 %s64, 64
  %p66 = scmp.le.s32.totalorder %s65, 64
  %v67 = vld [vmem:[%s44] sm:$0xff]
  %v68 = vld [vmem:[%s44 + $0x8] sm:$0xff]
  %v69 = vld [vmem:[%s44 + $0x10] sm:$0xff]
  %v70 = vld [vmem:[%s44 + $0x18] sm:$0xff]
  %v71 = vld [vmem:[%s44 + $0x20] sm:$0xff]
  %v72 = vld [vmem:[%s44 + $0x28] sm:$0xff]
  %v73 = vld [vmem:[%s44 + $0x30] sm:$0xff]
  %v74 = vld [vmem:[%s44 + $0x38] sm:$0xff]
  %v75 = vld [vmem:[%s52] sm:$0xff]
  %v76 = vld [vmem:[%s52 + $0x8] sm:$0xff]
  %v77 = vld [vmem:[%s52 + $0x10] sm:$0xff]
  %v78 = vld [vmem:[%s52 + $0x18] sm:$0xff]
  %v79 = vld [vmem:[%s52 + $0x20] sm:$0xff]
  %v80 = vld [vmem:[%s52 + $0x28] sm:$0xff]
  %v81 = vld [vmem:[%s52 + $0x30] sm:$0xff]
  %v82 = vld [vmem:[%s52 + $0x38] sm:$0xff]
  // Predicated region
  $region14: #{_loss_single.1} parent=0 // pred_check
    %p83 = pneg %p66
  $region15: #{_loss_single.1} parent=0 // pred_check_branch
    %85 = sbr.rel (%p83) target = $region17
  $region16: #{_loss_single.1} parent=0 // pred_region
    %v86 = vsub.f32 %v67, %v75
    %v87 = vsub.f32 %v68, %v76
    %v88 = vsub.f32 %v69, %v77
    %v89 = vsub.f32 %v70, %v78
    %v90 = vsub.f32 %v71, %v79
    %v91 = vsub.f32 %v72, %v80
    %v92 = vsub.f32 %v73, %v81
    %v93 = vsub.f32 %v74, %v82
    %v94 = vand.u32 2147483647, %v86
    %v95 = vand.u32 2147483647, %v87
    %v96 = vand.u32 2147483647, %v88
    %v97 = vand.u32 2147483647, %v89
    %v98 = vand.u32 2147483647, %v90
    %v99 = vand.u32 2147483647, %v91
    %v100 = vand.u32 2147483647, %v92
    %v101 = vand.u32 2147483647, %v93
    %v102 = vld [vmem:[%s2] sm:$0xff]
    %v103 = vld [vmem:[%s2 + $0x8] sm:$0xff]
    %v104 = vld [vmem:[%s2 + $0x10] sm:$0xff]
    %v105 = vld [vmem:[%s2 + $0x18] sm:$0xff]
    %v106 = vadd.f32 %v94, %v98
    %v107 = vadd.f32 %v95, %v99
    %v108 = vadd.f32 %v96, %v100
    %v109 = vadd.f32 %v97, %v101
    %v110 = vadd.f32 %v102, %v106
    %v111 = vadd.f32 %v103, %v107
    %v112 = vadd.f32 %v104, %v108
    %v113 = vadd.f32 %v105, %v109
    %114 = vst [vmem:[%s2] sm:$0xff] %v110
    %115 = vst [vmem:[%s2 + $0x8] sm:$0xff] %v111
    %116 = vst [vmem:[%s2 + $0x10] sm:$0xff] %v112
    %117 = vst [vmem:[%s2 + $0x18] sm:$0xff] %v113
  $region17: #{_loss_single.1} parent=0 // pred_fallthru
    _
  %p118 = scmp.gt.s32.totalorder %s65, 64
  // Predicated region
  $region18: #{_loss_single.1} parent=0 // pred_check
    %p119 = pneg %p118
  $region19: #{_loss_single.1} parent=0 // pred_check_branch
    %121 = sbr.rel (%p119) target = $region21
  $region20: #{_loss_single.1} parent=0 // pred_region
    %v122 = vlaneseq
    %v123 = vshrl.u32 %v122, 7
    %v124 = vadd.s32 %v123, 8
    %v125 = vadd.s32 %v123, 16
    %v126 = vadd.s32 %v123, 24
    %v127 = vadd.s32 %v123, 32
    %v128 = vadd.s32 %v123, 40
    %v129 = vadd.s32 %v123, 48
    %v130 = vadd.s32 %v123, 56
    %v131 = vstv %s64
    %v132 = vadd.s32 %v123, %v131
    %v133 = vadd.s32 %v124, %v131
    %v134 = vadd.s32 %v125, %v131
    %v135 = vadd.s32 %v126, %v131
    %v136 = vadd.s32 %v127, %v131
    %v137 = vadd.s32 %v128, %v131
    %v138 = vadd.s32 %v129, %v131
    %v139 = vadd.s32 %v130, %v131
    %vm140 = vcmp.lt.s32.totalorder %v132, 64
    %vm141 = vcmp.lt.s32.totalorder %v133, 64
    %vm142 = vcmp.lt.s32.totalorder %v134, 64
    %vm143 = vcmp.lt.s32.totalorder %v135, 64
    %vm144 = vcmp.lt.s32.totalorder %v136, 64
    %vm145 = vcmp.lt.s32.totalorder %v137, 64
    %vm146 = vcmp.lt.s32.totalorder %v138, 64
    %vm147 = vcmp.lt.s32.totalorder %v139, 64
    %v148 = vsub.f32 %v67, %v75
    %v149 = vsub.f32 %v68, %v76
    %v150 = vsub.f32 %v69, %v77
    %v151 = vsub.f32 %v70, %v78
    %v152 = vsub.f32 %v71, %v79
    %v153 = vsub.f32 %v72, %v80
    %v154 = vsub.f32 %v73, %v81
    %v155 = vsub.f32 %v74, %v82
    %v156 = vand.u32 2147483647, %v148
    %v157 = vand.u32 2147483647, %v149
    %v158 = vand.u32 2147483647, %v150
    %v159 = vand.u32 2147483647, %v151
    %v160 = vand.u32 2147483647, %v152
    %v161 = vand.u32 2147483647, %v153
    %v162 = vand.u32 2147483647, %v154
    %v163 = vand.u32 2147483647, %v155
    %v164 = vsel %vm140, 1, 0
    %v165 = vsel %vm141, 1, 0
    %v166 = vsel %vm142, 1, 0
    %v167 = vsel %vm143, 1, 0
    %v168 = vsel %vm144, 1, 0
    %v169 = vsel %vm145, 1, 0
    %v170 = vsel %vm146, 1, 0
    %v171 = vsel %vm147, 1, 0
    %vm172 = vcmp.eq.s32.totalorder %v164, 1
    %vm173 = vcmp.eq.s32.totalorder %v165, 1
    %vm174 = vcmp.eq.s32.totalorder %v166, 1
    %vm175 = vcmp.eq.s32.totalorder %v167, 1
    %vm176 = vcmp.eq.s32.totalorder %v168, 1
    %vm177 = vcmp.eq.s32.totalorder %v169, 1
    %vm178 = vcmp.eq.s32.totalorder %v170, 1
    %vm179 = vcmp.eq.s32.totalorder %v171, 1
    %v180 = vsel %vm172, %v156, 0.0
    %v181 = vsel %vm173, %v157, 0.0
    %v182 = vsel %vm174, %v158, 0.0
    %v183 = vsel %vm175, %v159, 0.0
    %v184 = vsel %vm176, %v160, 0.0
    %v185 = vsel %vm177, %v161, 0.0
    %v186 = vsel %vm178, %v162, 0.0
    %v187 = vsel %vm179, %v163, 0.0
    %v188 = vld [vmem:[%s2] sm:$0xff]
    %v189 = vld [vmem:[%s2 + $0x8] sm:$0xff]
    %v190 = vld [vmem:[%s2 + $0x10] sm:$0xff]
    %v191 = vld [vmem:[%s2 + $0x18] sm:$0xff]
    %v192 = vadd.f32 %v180, %v184
    %v193 = vadd.f32 %v181, %v185
    %v194 = vadd.f32 %v182, %v186
    %v195 = vadd.f32 %v183, %v187
    %v196 = vadd.f32 %v188, %v192
    %v197 = vadd.f32 %v189, %v193
    %v198 = vadd.f32 %v190, %v194
    %v199 = vadd.f32 %v191, %v195
    %200 = vst [vmem:[%s2] sm:$0xff] %v196
    %201 = vst [vmem:[%s2 + $0x8] sm:$0xff] %v197
    %202 = vst [vmem:[%s2 + $0x10] sm:$0xff] %v198
    %203 = vst [vmem:[%s2 + $0x18] sm:$0xff] %v199
  $region21: #{_loss_single.1} parent=0 // pred_fallthru
    _
  // Predicated region
  $region22: #{_loss_single.1} parent=0 // pred_check
    _
  $region23: #{_loss_single.1} parent=0 // pred_check_branch
    %205 = sbr.rel (0) target = $region25
  $region24: #{_loss_single.1} parent=0 // pred_region
    _
  $region25: #{_loss_single.1} parent=0 // pred_fallthru
    _
  // Predicated region
  $region26: #{_loss_single.1} parent=0 // pred_check
    _
  $region27: #{_loss_single.1} parent=0 // pred_check_branch
    %207 = sbr.rel (0) target = $region29
  $region28: #{_loss_single.1} parent=0 // pred_region
    _
  $region29: #{_loss_single.1} parent=0 // pred_fallthru
    _

</llo_original>
